<compile_context>
chip_gen: v5e
topology: v5e:2x2
jax: 0.10.0
libtpu: 0.0.40
codegen_flags: <defaults>
</compile_context>

<pallas_src>
import jax
import jax.numpy as jnp
from jax.experimental import pallas as pl
from jax.experimental.pallas import tpu as pltpu

PATCH = 4
D_PATCH = 3 * PATCH * PATCH        # 48 = C * kh * kw (im2col contraction dim)
EMBED = 768                        # swin_t feature dim (backbone output)
HIDDEN = 512                       # classifier hidden dim
NUM_CLASSES = 36
OUT_PAD = 128                      # lane-dense padded output width
TILE_B_MAX = 512                   # batch-tile rows per grid step


def _round_up(n, m):
    return ((n + m - 1) // m) * m


def mmim_kernel(pmean_ref, w_fold_ref, b_fold_ref, w2_ref, b2_ref, out_ref):
    # Folded backbone-stub + Linear(768,512):  (tile_b,48) @ (48,512) + b
    h = jnp.dot(pmean_ref[...], w_fold_ref[...],
                preferred_element_type=jnp.float32) + b_fold_ref[...]
    # ReLU (f32 on the VPU) -> Dropout(identity at eval) -> Linear(512,36 padded to 128)
    h = jnp.maximum(h, 0.0)
    out = jnp.dot(h.astype(jnp.bfloat16), w2_ref[...],
                  preferred_element_type=jnp.float32) + b2_ref[...]
    out_ref[...] = out.astype(out_ref.dtype)


def init_params(key):
    """Torch-layout parameters (unpadded, f32)."""
    k = jax.random.split(key, 3)
    return dict(
        w_pe=jax.random.normal(k[0], (D_PATCH, EMBED), jnp.float32) / jnp.sqrt(D_PATCH),
        b_pe=jnp.zeros((EMBED,), jnp.float32),
        w1=jax.random.normal(k[1], (EMBED, HIDDEN), jnp.float32) / jnp.sqrt(EMBED),
        b1=jnp.zeros((HIDDEN,), jnp.float32),
        w2=jax.random.normal(k[2], (HIDDEN, NUM_CLASSES), jnp.float32) / jnp.sqrt(HIDDEN),
        b2=jnp.zeros((NUM_CLASSES,), jnp.float32),
    )


def pack_params(params):
    """Fold patch-embed into W1 (exact, pre-ReLU) and pad/pack for the kernel.

    GEMM weights bf16; biases f32 with shape (1, N) for lane-dense broadcast.
    """
    # Fold: mean_P(patches) @ W_pe + b_pe, then @ W1 + b1
    #   ==  mean_P(patches) @ (W_pe @ W1)  +  (b_pe @ W1 + b1)
    w_fold = (params["w_pe"] @ params["w1"]).astype(jnp.bfloat16)          # (48, 512)
    b_fold = (params["b_pe"] @ params["w1"] + params["b1"]).reshape(1, HIDDEN)

    w2 = jnp.pad(params["w2"],
                 ((0, 0), (0, OUT_PAD - NUM_CLASSES))).astype(jnp.bfloat16)  # (512, 128)
    b2 = jnp.pad(params["b2"], (0, OUT_PAD - NUM_CLASSES)).reshape(1, OUT_PAD)
    return dict(
        w_fold=w_fold,
        b_fold=b_fold.astype(jnp.float32),
        w2=w2,
        b2=b2.astype(jnp.float32),
    )


@jax.jit
def mmim_forward(x, packed):
    # x: (B, 3, H, W) NCHW, same as the PyTorch module.
    B, C, H, W = x.shape
    ph, pw = H // PATCH, W // PATCH

    # Linearity hoist: mean over patch positions before the (folded) embed GEMM.
    # (C, kh, kw) ordering matches a torch Conv2d(kernel=4, stride=4) im2col,
    # i.e. conv_weight.reshape(768, -1).T would line up with w_pe here.
    pmean = x.astype(jnp.float32).reshape(B, C, ph, PATCH, pw, PATCH)
    pmean = pmean.mean(axis=(2, 4)).reshape(B, C * PATCH * PATCH)     # (B, 48)

    # Batch tiling: pick the number of grid steps first, then derive tile_b,
    # so padding waste is <= one 16-row sublane group per tile and v7x gets
    # >= 2 steps to shard across its two TensorCores whenever B >= 32.
    b16 = _round_up(B, 16)                      # bf16 sublane packing
    min_tiles = 2 if b16 >= 32 else 1
    num_tiles = max(pl.cdiv(b16, TILE_B_MAX), min_tiles)
    tile_b = _round_up(pl.cdiv(b16, num_tiles), 16)
    b_pad = num_tiles * tile_b

    pmean = jnp.pad(pmean, ((0, b_pad - B), (0, 0))).astype(jnp.bfloat16)

    grid = (num_tiles,)

    flops = 2 * b_pad * (D_PATCH * HIDDEN + HIDDEN * OUT_PAD)
    bytes_accessed = (
        int(pmean.size) * 2
        + sum(int(v.size) * jnp.dtype(v.dtype).itemsize for v in packed.values())
        + b_pad * OUT_PAD * 2
    )

    out = pl.pallas_call(
        mmim_kernel,
        out_shape=jax.ShapeDtypeStruct((b_pad, OUT_PAD), jnp.bfloat16),
        grid_spec=pltpu.PrefetchScalarGridSpec(
            num_scalar_prefetch=0,
            grid=grid,
            in_specs=[
                pl.BlockSpec((tile_b, D_PATCH), lambda i: (i, 0)),    # pmean (K=48 full dim)
                pl.BlockSpec((D_PATCH, HIDDEN), lambda i: (0, 0)),    # w_fold (resident)
                pl.BlockSpec((1, HIDDEN), lambda i: (0, 0)),          # b_fold
                pl.BlockSpec((HIDDEN, OUT_PAD), lambda i: (0, 0)),    # w2
                pl.BlockSpec((1, OUT_PAD), lambda i: (0, 0)),         # b2
            ],
            out_specs=pl.BlockSpec((tile_b, OUT_PAD), lambda i: (i, 0)),
        ),
        compiler_params=pltpu.CompilerParams(
            dimension_semantics=("parallel",)),
        cost_estimate=pl.CostEstimate(
            flops=flops, transcendentals=0, bytes_accessed=bytes_accessed),
    )(pmean, packed["w_fold"], packed["b_fold"], packed["w2"], packed["b2"])

    # Strip batch / class padding and upcast outside (keeps stores lane-dense).
    return out[:B, :NUM_CLASSES].astype(jnp.float32)


if __name__ == "__main__":
    key = jax.random.PRNGKey(0)
    kx, kp = jax.random.split(key)

    # Small synthetic NCHW input consistent with the module (RGB, H,W % 4 == 0).
    x = jax.random.normal(kx, (2, 3, 32, 32), jnp.float32)
    params = init_params(kp)
    packed = pack_params(params)

    out = mmim_forward(x, packed)
    jax.block_until_ready(out)

    assert out.shape == (2, NUM_CLASSES), out.shape
    assert bool(jnp.all(jnp.isfinite(out)))
    print("KERNEL_OK")
</pallas_src>

<mosaic_0001>
module attributes {stable_mosaic.version = 11 : i64} {
  func.func @mmim_kernel(%arg0: i32, %arg1: memref<16x48xbf16, #tpu.memory_space<vmem>>, %arg2: memref<48x512xbf16, #tpu.memory_space<vmem>>, %arg3: memref<1x512xf32, #tpu.memory_space<vmem>>, %arg4: memref<512x128xbf16, #tpu.memory_space<vmem>>, %arg5: memref<1x128xf32, #tpu.memory_space<vmem>>, %arg6: memref<16x128xbf16, #tpu.memory_space<vmem>>) attributes {dimension_semantics = [#tpu.dimension_semantics<parallel>], iteration_bounds = array<i64: 1>, scalar_prefetch = 0 : i64, scratch_operands = 0 : i64, tpu.core_type = #tpu.core_type<tc>, window_params = [{transform_indices = @transform_0, window_bounds = array<i64: 16, 48>}, {pipeline_mode = #tpu.pipeline_mode<synchronous>, transform_indices = @transform_1, window_bounds = array<i64: 48, 512>}, {pipeline_mode = #tpu.pipeline_mode<synchronous>, transform_indices = @transform_2, window_bounds = array<i64: 1, 512>}, {pipeline_mode = #tpu.pipeline_mode<synchronous>, transform_indices = @transform_3, window_bounds = array<i64: 512, 128>}, {pipeline_mode = #tpu.pipeline_mode<synchronous>, transform_indices = @transform_4, window_bounds = array<i64: 1, 128>}, {transform_indices = @transform_5, window_bounds = array<i64: 16, 128>}]} {
    %c0 = arith.constant 0 : index
    %c0_0 = arith.constant 0 : index
    %0 = vector.load %arg1[%c0, %c0_0] : memref<16x48xbf16, #tpu.memory_space<vmem>>, vector<16x48xbf16>
    %c0_1 = arith.constant 0 : index
    %c0_2 = arith.constant 0 : index
    %1 = vector.load %arg2[%c0_1, %c0_2] : memref<48x512xbf16, #tpu.memory_space<vmem>>, vector<48x512xbf16>
    %cst = arith.constant dense<0.000000e+00> : vector<16x512xf32>
    %2 = tpu.matmul %0, %1, %cst {dimension_numbers = #tpu.dot_dimension_numbers<[1], [0], [0], [1], [0, 0, 1, 1], [], []>} : vector<16x48xbf16>, vector<48x512xbf16>, vector<16x512xf32> -> vector<16x512xf32>
    %c0_3 = arith.constant 0 : index
    %c0_4 = arith.constant 0 : index
    %3 = vector.load %arg3[%c0_3, %c0_4] : memref<1x512xf32, #tpu.memory_space<vmem>>, vector<1x512xf32>
    %4 = vector.broadcast %3 : vector<1x512xf32> to vector<16x512xf32>
    %5 = arith.addf %2, %4 : vector<16x512xf32>
    %cst_5 = arith.constant 0.000000e+00 : f32
    %6 = vector.broadcast %cst_5 : f32 to vector<16x512xf32>
    %7 = arith.maximumf %5, %6 : vector<16x512xf32>
    %8 = arith.truncf %7 : vector<16x512xf32> to vector<16x512xbf16>
    %c0_6 = arith.constant 0 : index
    %c0_7 = arith.constant 0 : index
    %9 = vector.load %arg4[%c0_6, %c0_7] : memref<512x128xbf16, #tpu.memory_space<vmem>>, vector<512x128xbf16>
    %cst_8 = arith.constant dense<0.000000e+00> : vector<16x128xf32>
    %10 = tpu.matmul %8, %9, %cst_8 {dimension_numbers = #tpu.dot_dimension_numbers<[1], [0], [0], [1], [0, 0, 1, 1], [], []>} : vector<16x512xbf16>, vector<512x128xbf16>, vector<16x128xf32> -> vector<16x128xf32>
    %c0_9 = arith.constant 0 : index
    %c0_10 = arith.constant 0 : index
    %11 = vector.load %arg5[%c0_9, %c0_10] : memref<1x128xf32, #tpu.memory_space<vmem>>, vector<1x128xf32>
    %12 = vector.broadcast %11 : vector<1x128xf32> to vector<16x128xf32>
    %13 = arith.addf %10, %12 : vector<16x128xf32>
    %14 = arith.truncf %13 : vector<16x128xf32> to vector<16x128xbf16>
    %c0_11 = arith.constant 0 : index
    %c0_12 = arith.constant 0 : index
    %15 = vector.load %arg6[%c0_11, %c0_12] : memref<16x128xbf16, #tpu.memory_space<vmem>>, vector<16x128xbf16>
    tpu.vector_store %arg6[%c0_11, %c0_12], %14 {strides = array<i32>} : memref<16x128xbf16, #tpu.memory_space<vmem>>, vector<16x128xbf16>,
    return
  }
  func.func @transform_0(%arg0: i32) -> (i32, i32) {
    %c0_i32 = arith.constant 0 : i32
    %c0_i32_0 = arith.constant 0 : i32
    return %arg0, %c0_i32 : i32, i32
  }
  func.func @transform_1(%arg0: i32) -> (i32, i32) {
    %c0_i32 = arith.constant 0 : i32
    %c0_i32_0 = arith.constant 0 : i32
    %c0_i32_1 = arith.constant 0 : i32
    return %c0_i32, %c0_i32_0 : i32, i32
  }
  func.func @transform_2(%arg0: i32) -> (i32, i32) {
    %c0_i32 = arith.constant 0 : i32
    %c0_i32_0 = arith.constant 0 : i32
    %c0_i32_1 = arith.constant 0 : i32
    return %c0_i32, %c0_i32_0 : i32, i32
  }
  func.func @transform_3(%arg0: i32) -> (i32, i32) {
    %c0_i32 = arith.constant 0 : i32
    %c0_i32_0 = arith.constant 0 : i32
    %c0_i32_1 = arith.constant 0 : i32
    return %c0_i32, %c0_i32_0 : i32, i32
  }
  func.func @transform_4(%arg0: i32) -> (i32, i32) {
    %c0_i32 = arith.constant 0 : i32
    %c0_i32_0 = arith.constant 0 : i32
    %c0_i32_1 = arith.constant 0 : i32
    return %c0_i32, %c0_i32_0 : i32, i32
  }
  func.func @transform_5(%arg0: i32) -> (i32, i32) {
    %c0_i32 = arith.constant 0 : i32
    %c0_i32_0 = arith.constant 0 : i32
    return %arg0, %c0_i32 : i32, i32
  }
}

</mosaic_0001>

<llo_original>
// kernel: mmim_forward.1
$region0: #{mmim_forward.1}
  #allocation0 [shape = 'u32[]', space=smem, size = 0x4, offset = 0x4, fixed_abs, tag = 'smem constant byte address 0x4 - core index']
  #allocation1 [shape = 'u32[72,128]{1,0:T(1,128)}', space=vmem, size = 0x9000, scoped, tag = 'internal scratch']
  %s0 = inlined_call_operand.vmem [shape: bf16[16,48], index: 0, kind: input, shape index: {}]
  %s1 = inlined_call_operand.vmem [shape: bf16[48,512], index: 1, kind: input, shape index: {}]
  %s2 = inlined_call_operand.vmem [shape: f32[1,512], index: 2, kind: input, shape index: {}]
  %s3 = inlined_call_operand.vmem [shape: bf16[512,128], index: 3, kind: input, shape index: {}]
  %s4 = inlined_call_operand.vmem [shape: f32[1,128], index: 4, kind: input, shape index: {}]
  %s5 = inlined_call_operand.vmem [shape: bf16[16,128], index: 5, kind: output, shape index: {}]
  %s6 = sld [smem:[#allocation0]]
  $region30: #{mmim_forward.1} parent=0
    _
  %s8 = ssub.s32 1, %s6
  %s9 = scalar_select 0, %s8, %s6
  // Predicated region
  $region2: #{mmim_forward.1} parent=0 // pred_check
    _
  $region3: #{mmim_forward.1} parent=0 // pred_check_branch
    %11 = sbr.rel (0) target = $region5
  $region4: #{mmim_forward.1} parent=0 // pred_region
    _
  $region5: #{mmim_forward.1} parent=0 // pred_fallthru
    _
  // Predicated region
  $region6: #{mmim_forward.1} parent=0 // pred_check
    _
  $region7: #{mmim_forward.1} parent=0 // pred_check_branch
    %13 = sbr.rel (0) target = $region9
  $region8: #{mmim_forward.1} parent=0 // pred_region
    _
  $region9: #{mmim_forward.1} parent=0 // pred_fallthru
    _
  // Predicated region
  $region10: #{mmim_forward.1} parent=0 // pred_check
    _
  $region11: #{mmim_forward.1} parent=0 // pred_check_branch
    %15 = sbr.rel (0) target = $region13
  $region12: #{mmim_forward.1} parent=0 // pred_region
    _
  $region13: #{mmim_forward.1} parent=0 // pred_fallthru
    _
  // Predicated region
  $region14: #{mmim_forward.1} parent=0 // pred_check
    _
  $region15: #{mmim_forward.1} parent=0 // pred_check_branch
    %17 = sbr.rel (0) target = $region17
  $region16: #{mmim_forward.1} parent=0 // pred_region
    _
  $region17: #{mmim_forward.1} parent=0 // pred_fallthru
    _
  // Predicated region
  $region18: #{mmim_forward.1} parent=0 // pred_check
    _
  $region19: #{mmim_forward.1} parent=0 // pred_check_branch
    %19 = sbr.rel (0) target = $region21
  $region20: #{mmim_forward.1} parent=0 // pred_region
    _
  $region21: #{mmim_forward.1} parent=0 // pred_fallthru
    _
  %v21 = vld [vmem:[%s0] sm:$0xf]
  %v22 = vld [vmem:[%s0 + $0x4] sm:$0xf]
  %v23 = vld [vmem:[%s1] sm:$0xff]
  %v24 = vld [vmem:[%s1 + $0x8] sm:$0xff]
  %v25 = vld [vmem:[%s1 + $0x10] sm:$0xff]
  %v26 = vld [vmem:[%s1 + $0x18] sm:$0xff]
  %v27 = vld [vmem:[%s1 + $0x20] sm:$0xff]
  %v28 = vld [vmem:[%s1 + $0x28] sm:$0xff]
  %v29 = vld [vmem:[%s1 + $0x30] sm:$0xff]
  %v30 = vld [vmem:[%s1 + $0x38] sm:$0xff]
  %v31 = vld [vmem:[%s1 + $0x40] sm:$0xff]
  %v32 = vld [vmem:[%s1 + $0x48] sm:$0xff]
  %v33 = vld [vmem:[%s1 + $0x50] sm:$0xff]
  %v34 = vld [vmem:[%s1 + $0x58] sm:$0xff]
  %v35 = vld [vmem:[%s2] sm:$0xf]
  %v37 = vperm.slane %v35, 0
  %v38 = vperm.slane %v35, 1
  %v39 = vperm.slane %v35, 2
  %v40 = vperm.slane %v35, 3
  %v47 = vunpack.c.l.b16 %v21
  %v48 = vunpack.c.l.b16 %v22
  %v49 = vpack.c.b16 %v48, %v47
  %v62 = vunpack.c.l.b16 %v23
  %v63 = vunpack.c.h.b16 %v23
  %v64 = vunpack.c.l.b16 %v24
  %v65 = vunpack.c.h.b16 %v24
  %v66 = vunpack.c.l.b16 %v25
  %v67 = vunpack.c.h.b16 %v25
  %v68 = vunpack.c.l.b16 %v26
  %v69 = vunpack.c.h.b16 %v26
  %v70 = vunpack.c.l.b16 %v27
  %v71 = vunpack.c.h.b16 %v27
  %v72 = vunpack.c.l.b16 %v28
  %v73 = vunpack.c.h.b16 %v28
  %v74 = vunpack.c.l.b16 %v29
  %v75 = vunpack.c.h.b16 %v29
  %v76 = vunpack.c.l.b16 %v30
  %v77 = vunpack.c.h.b16 %v30
  %v78 = vunpack.c.l.b16 %v31
  %v79 = vunpack.c.h.b16 %v31
  %v80 = vunpack.c.l.b16 %v32
  %v81 = vunpack.c.h.b16 %v32
  %v82 = vunpack.c.l.b16 %v33
  %v83 = vunpack.c.h.b16 %v33
  %v84 = vunpack.c.l.b16 %v34
  %v85 = vunpack.c.h.b16 %v34
  %v86 = vpack.c.b16 %v66, %v62
  %v87 = vpack.c.b16 %v67, %v63
  %v88 = vpack.c.b16 %v68, %v64
  %v89 = vpack.c.b16 %v69, %v65
  %v90 = vpack.c.b16 %v74, %v70
  %v91 = vpack.c.b16 %v75, %v71
  %v92 = vpack.c.b16 %v76, %v72
  %v93 = vpack.c.b16 %v77, %v73
  %v94 = vpack.c.b16 %v82, %v78
  %v95 = vpack.c.b16 %v83, %v79
  %v96 = vpack.c.b16 %v84, %v80
  %v97 = vpack.c.b16 %v85, %v81
  %vm110 = vcmask 392192
  %v112 = vsel %vm110, %v49, 0
  %114 = vmatpush.bf16.msra.mxu0 0
  %115 = vmatpush.bf16.msra.mxu0 0
  %116 = vmatpush.bf16.msra.mxu0 0
  %117 = vmatpush.bf16.msra.mxu0 0
  %118 = vmatpush.bf16.msra.mxu0 0
  %119 = vmatpush.bf16.msra.mxu0 %v94
  %120 = vmatpush.bf16.msra.mxu0 %v90
  %121 = vmatpush.bf16.msra.mxu0 %v86
  %122 = vmatmul.bf16.gmra.mxu0 %v112
  %v123 = vpop.f32.mrf.mxu0
  %v124 = vadd.f32 %v37, %v123
  %v125 = vpop.f32.mrf.mxu0
  %v126 = vadd.f32 %v37, %v125
  %127 = vdwg.mxu0
  %128 = vmatpush.bf16.msra.mxu0 0
  %129 = vmatpush.bf16.msra.mxu0 0
  %130 = vmatpush.bf16.msra.mxu0 0
  %131 = vmatpush.bf16.msra.mxu0 0
  %132 = vmatpush.bf16.msra.mxu0 0
  %133 = vmatpush.bf16.msra.mxu0 %v95
  %134 = vmatpush.bf16.msra.mxu0 %v91
  %135 = vmatpush.bf16.msra.mxu0 %v87
  %136 = vmatmul.bf16.gmra.mxu0 %v112
  %v137 = vpop.f32.mrf.mxu0
  %v138 = vadd.f32 %v38, %v137
  %v139 = vpop.f32.mrf.mxu0
  %v140 = vadd.f32 %v38, %v139
  %141 = vdwg.mxu0
  %142 = vmatpush.bf16.msra.mxu0 0
  %143 = vmatpush.bf16.msra.mxu0 0
  %144 = vmatpush.bf16.msra.mxu0 0
  %145 = vmatpush.bf16.msra.mxu0 0
  %146 = vmatpush.bf16.msra.mxu0 0
  %147 = vmatpush.bf16.msra.mxu0 %v96
  %148 = vmatpush.bf16.msra.mxu0 %v92
  %149 = vmatpush.bf16.msra.mxu0 %v88
  %150 = vmatmul.bf16.gmra.mxu0 %v112
  %v151 = vpop.f32.mrf.mxu0
  %v152 = vadd.f32 %v39, %v151
  %v153 = vpop.f32.mrf.mxu0
  %v154 = vadd.f32 %v39, %v153
  %155 = vdwg.mxu0
  %156 = vmatpush.bf16.msra.mxu0 0
  %157 = vmatpush.bf16.msra.mxu0 0
  %158 = vmatpush.bf16.msra.mxu0 0
  %159 = vmatpush.bf16.msra.mxu0 0
  %160 = vmatpush.bf16.msra.mxu0 0
  %161 = vmatpush.bf16.msra.mxu0 %v97
  %162 = vmatpush.bf16.msra.mxu0 %v93
  %163 = vmatpush.bf16.msra.mxu0 %v89
  %164 = vmatmul.bf16.gmra.mxu0 %v112
  %v165 = vpop.f32.mrf.mxu0
  %v166 = vadd.f32 %v40, %v165
  %v167 = vpop.f32.mrf.mxu0
  %v168 = vadd.f32 %v40, %v167
  %169 = vdwg.mxu0
  %v170 = vmax.f32 %v124, 0.0
  %v171 = vmax.f32 %v138, 0.0
  %v172 = vmax.f32 %v152, 0.0
  %v173 = vmax.f32 %v166, 0.0
  %v174 = vmax.f32 %v126, 0.0
  %v175 = vmax.f32 %v140, 0.0
  %v176 = vmax.f32 %v154, 0.0
  %v177 = vmax.f32 %v168, 0.0
  %v178 = vpack.c.bf16 %v174, %v170
  %v179 = vpack.c.bf16 %v175, %v171
  %v180 = vpack.c.bf16 %v176, %v172
  %v181 = vpack.c.bf16 %v177, %v173
  %v182 = vld [vmem:[%s3] sm:$0xf]
  %v183 = vld [vmem:[%s3 + $0x4] sm:$0xf]
  %v184 = vld [vmem:[%s3 + $0x8] sm:$0xf]
  %v185 = vld [vmem:[%s3 + $0xc] sm:$0xf]
  %v186 = vld [vmem:[%s3 + $0x10] sm:$0xf]
  %v187 = vld [vmem:[%s3 + $0x14] sm:$0xf]
  %v188 = vld [vmem:[%s3 + $0x18] sm:$0xf]
  %v189 = vld [vmem:[%s3 + $0x1c] sm:$0xf]
  %v190 = vld [vmem:[%s3 + $0x20] sm:$0xf]
  %v191 = vld [vmem:[%s3 + $0x24] sm:$0xf]
  %v192 = vld [vmem:[%s3 + $0x28] sm:$0xf]
  %v193 = vld [vmem:[%s3 + $0x2c] sm:$0xf]
  %v194 = vld [vmem:[%s3 + $0x30] sm:$0xf]
  %v195 = vld [vmem:[%s3 + $0x34] sm:$0xf]
  %v196 = vld [vmem:[%s3 + $0x38] sm:$0xf]
  %v197 = vld [vmem:[%s3 + $0x3c] sm:$0xf]
  %v198 = vld [vmem:[%s3 + $0x40] sm:$0xf]
  %v199 = vld [vmem:[%s3 + $0x44] sm:$0xf]
  %v200 = vld [vmem:[%s3 + $0x48] sm:$0xf]
  %v201 = vld [vmem:[%s3 + $0x4c] sm:$0xf]
  %v202 = vld [vmem:[%s3 + $0x50] sm:$0xf]
  %v203 = vld [vmem:[%s3 + $0x54] sm:$0xf]
  %v204 = vld [vmem:[%s3 + $0x58] sm:$0xf]
  %v205 = vld [vmem:[%s3 + $0x5c] sm:$0xf]
  %v206 = vld [vmem:[%s3 + $0x60] sm:$0xf]
  %v207 = vld [vmem:[%s3 + $0x64] sm:$0xf]
  %v208 = vld [vmem:[%s3 + $0x68] sm:$0xf]
  %v209 = vld [vmem:[%s3 + $0x6c] sm:$0xf]
  %v210 = vld [vmem:[%s3 + $0x70] sm:$0xf]
  %v211 = vld [vmem:[%s3 + $0x74] sm:$0xf]
  %v212 = vld [vmem:[%s3 + $0x78] sm:$0xf]
  %v213 = vld [vmem:[%s3 + $0x7c] sm:$0xf]
  %v214 = vld [vmem:[%s3 + $0x80] sm:$0xf]
  %v215 = vld [vmem:[%s3 + $0x84] sm:$0xf]
  %v216 = vld [vmem:[%s3 + $0x88] sm:$0xf]
  %v217 = vld [vmem:[%s3 + $0x8c] sm:$0xf]
  %v218 = vld [vmem:[%s3 + $0x90] sm:$0xf]
  %v219 = vld [vmem:[%s3 + $0x94] sm:$0xf]
  %v220 = vld [vmem:[%s3 + $0x98] sm:$0xf]
  %v221 = vld [vmem:[%s3 + $0x9c] sm:$0xf]
  %v222 = vld [vmem:[%s3 + $0xa0] sm:$0xf]
  %v223 = vld [vmem:[%s3 + $0xa4] sm:$0xf]
  %v224 = vld [vmem:[%s3 + $0xa8] sm:$0xf]
  %v225 = vld [vmem:[%s3 + $0xac] sm:$0xf]
  %v226 = vld [vmem:[%s3 + $0xb0] sm:$0xf]
  %v227 = vld [vmem:[%s3 + $0xb4] sm:$0xf]
  %v228 = vld [vmem:[%s3 + $0xb8] sm:$0xf]
  %v229 = vld [vmem:[%s3 + $0xbc] sm:$0xf]
  %v230 = vld [vmem:[%s3 + $0xc0] sm:$0xf]
  %v231 = vld [vmem:[%s3 + $0xc4] sm:$0xf]
  %v232 = vld [vmem:[%s3 + $0xc8] sm:$0xf]
  %v233 = vld [vmem:[%s3 + $0xcc] sm:$0xf]
  %v234 = vld [vmem:[%s3 + $0xd0] sm:$0xf]
  %v235 = vld [vmem:[%s3 + $0xd4] sm:$0xf]
  %v236 = vld [vmem:[%s3 + $0xd8] sm:$0xf]
  %v237 = vld [vmem:[%s3 + $0xdc] sm:$0xf]
  %v238 = vld [vmem:[%s3 + $0xe0] sm:$0xf]
  %v239 = vld [vmem:[%s3 + $0xe4] sm:$0xf]
  %v240 = vld [vmem:[%s3 + $0xe8] sm:$0xf]
  %v241 = vld [vmem:[%s3 + $0xec] sm:$0xf]
  %v242 = vld [vmem:[%s3 + $0xf0] sm:$0xf]
  %v243 = vld [vmem:[%s3 + $0xf4] sm:$0xf]
  %v244 = vld [vmem:[%s3 + $0xf8] sm:$0xf]
  %v245 = vld [vmem:[%s3 + $0xfc] sm:$0xf]
  %v246 = vld [vmem:[%s4] sm:$0x1]
  %v248 = vperm.slane %v246, 0
  %v314 = vunpack.c.l.b16 %v182
  %v315 = vunpack.c.l.b16 %v183
  %v316 = vunpack.c.l.b16 %v184
  %v317 = vunpack.c.l.b16 %v185
  %v318 = vunpack.c.l.b16 %v186
  %v319 = vunpack.c.l.b16 %v187
  %v320 = vunpack.c.l.b16 %v188
  %v321 = vunpack.c.l.b16 %v189
  %v322 = vunpack.c.l.b16 %v190
  %v323 = vunpack.c.l.b16 %v191
  %v324 = vunpack.c.l.b16 %v192
  %v325 = vunpack.c.l.b16 %v193
  %v326 = vunpack.c.l.b16 %v194
  %v327 = vunpack.c.l.b16 %v195
  %v328 = vunpack.c.l.b16 %v196
  %v329 = vunpack.c.l.b16 %v197
  %v330 = vunpack.c.l.b16 %v198
  %v331 = vunpack.c.l.b16 %v199
  %v332 = vunpack.c.l.b16 %v200
  %v333 = vunpack.c.l.b16 %v201
  %v334 = vunpack.c.l.b16 %v202
  %v335 = vunpack.c.l.b16 %v203
  %v336 = vunpack.c.l.b16 %v204
  %v337 = vunpack.c.l.b16 %v205
  %v338 = vunpack.c.l.b16 %v206
  %v339 = vunpack.c.l.b16 %v207
  %v340 = vunpack.c.l.b16 %v208
  %v341 = vunpack.c.l.b16 %v209
  %v342 = vunpack.c.l.b16 %v210
  %v343 = vunpack.c.l.b16 %v211
  %v344 = vunpack.c.l.b16 %v212
  %v345 = vunpack.c.l.b16 %v213
  %v346 = vunpack.c.l.b16 %v214
  %v347 = vunpack.c.l.b16 %v215
  %v348 = vunpack.c.l.b16 %v216
  %v349 = vunpack.c.l.b16 %v217
  %v350 = vunpack.c.l.b16 %v218
  %v351 = vunpack.c.l.b16 %v219
  %v352 = vunpack.c.l.b16 %v220
  %v353 = vunpack.c.l.b16 %v221
  %v354 = vunpack.c.l.b16 %v222
  %v355 = vunpack.c.l.b16 %v223
  %v356 = vunpack.c.l.b16 %v224
  %v357 = vunpack.c.l.b16 %v225
  %v358 = vunpack.c.l.b16 %v226
  %v359 = vunpack.c.l.b16 %v227
  %v360 = vunpack.c.l.b16 %v228
  %v361 = vunpack.c.l.b16 %v229
  %v362 = vunpack.c.l.b16 %v230
  %v363 = vunpack.c.l.b16 %v231
  %v364 = vunpack.c.l.b16 %v232
  %v365 = vunpack.c.l.b16 %v233
  %v366 = vunpack.c.l.b16 %v234
  %v367 = vunpack.c.l.b16 %v235
  %v368 = vunpack.c.l.b16 %v236
  %v369 = vunpack.c.l.b16 %v237
  %v370 = vunpack.c.l.b16 %v238
  %v371 = vunpack.c.l.b16 %v239
  %v372 = vunpack.c.l.b16 %v240
  %v373 = vunpack.c.l.b16 %v241
  %v374 = vunpack.c.l.b16 %v242
  %v375 = vunpack.c.l.b16 %v243
  %v376 = vunpack.c.l.b16 %v244
  %v377 = vunpack.c.l.b16 %v245
  %v378 = vpack.c.b16 %v315, %v314
  %v379 = vpack.c.b16 %v317, %v316
  %v380 = vpack.c.b16 %v319, %v318
  %v381 = vpack.c.b16 %v321, %v320
  %v382 = vpack.c.b16 %v323, %v322
  %v383 = vpack.c.b16 %v325, %v324
  %v384 = vpack.c.b16 %v327, %v326
  %v385 = vpack.c.b16 %v329, %v328
  %v386 = vpack.c.b16 %v331, %v330
  %v387 = vpack.c.b16 %v333, %v332
  %v388 = vpack.c.b16 %v335, %v334
  %v389 = vpack.c.b16 %v337, %v336
  %v390 = vpack.c.b16 %v339, %v338
  %v391 = vpack.c.b16 %v341, %v340
  %v392 = vpack.c.b16 %v343, %v342
  %v393 = vpack.c.b16 %v345, %v344
  %v394 = vpack.c.b16 %v347, %v346
  %v395 = vpack.c.b16 %v349, %v348
  %v396 = vpack.c.b16 %v351, %v350
  %v397 = vpack.c.b16 %v353, %v352
  %v398 = vpack.c.b16 %v355, %v354
  %v399 = vpack.c.b16 %v357, %v356
  %v400 = vpack.c.b16 %v359, %v358
  %v401 = vpack.c.b16 %v361, %v360
  %v402 = vpack.c.b16 %v363, %v362
  %v403 = vpack.c.b16 %v365, %v364
  %v404 = vpack.c.b16 %v367, %v366
  %v405 = vpack.c.b16 %v369, %v368
  %v406 = vpack.c.b16 %v371, %v370
  %v407 = vpack.c.b16 %v373, %v372
  %v408 = vpack.c.b16 %v375, %v374
  %v409 = vpack.c.b16 %v377, %v376
  %442 = vmatpush.bf16.msra.mxu0 %v385
  %443 = vmatpush.bf16.msra.mxu0 %v384
  %444 = vmatpush.bf16.msra.mxu0 %v383
  %445 = vmatpush.bf16.msra.mxu0 %v382
  %446 = vmatpush.bf16.msra.mxu0 %v381
  %447 = vmatpush.bf16.msra.mxu0 %v380
  %448 = vmatpush.bf16.msra.mxu0 %v379
  %449 = vmatpush.bf16.msra.mxu0 %v378
  %450 = vmatmul.bf16.gmra.mxu0 %v178
  %v451 = vpop.f32.mrf.mxu0
  %v452 = vadd.f32 %v248, %v451
  %v453 = vpop.f32.mrf.mxu0
  %v454 = vadd.f32 %v248, %v453
  %455 = vdwg.mxu0
  %456 = vmatpush.bf16.msra.mxu0 %v393
  %457 = vmatpush.bf16.msra.mxu0 %v392
  %458 = vmatpush.bf16.msra.mxu0 %v391
  %459 = vmatpush.bf16.msra.mxu0 %v390
  %460 = vmatpush.bf16.msra.mxu0 %v389
  %461 = vmatpush.bf16.msra.mxu0 %v388
  %462 = vmatpush.bf16.msra.mxu0 %v387
  %463 = vmatpush.bf16.msra.mxu0 %v386
  %464 = vmatmul.bf16.gmra.mxu0 %v179
  %v465 = vpop.f32.mrf.mxu0
  %v466 = vadd.f32 %v452, %v465
  %v467 = vpop.f32.mrf.mxu0
  %v468 = vadd.f32 %v454, %v467
  %469 = vdwg.mxu0
  %470 = vmatpush.bf16.msra.mxu0 %v401
  %471 = vmatpush.bf16.msra.mxu0 %v400
  %472 = vmatpush.bf16.msra.mxu0 %v399
  %473 = vmatpush.bf16.msra.mxu0 %v398
  %474 = vmatpush.bf16.msra.mxu0 %v397
  %475 = vmatpush.bf16.msra.mxu0 %v396
  %476 = vmatpush.bf16.msra.mxu0 %v395
  %477 = vmatpush.bf16.msra.mxu0 %v394
  %478 = vmatmul.bf16.gmra.mxu0 %v180
  %v479 = vpop.f32.mrf.mxu0
  %v480 = vadd.f32 %v466, %v479
  %v481 = vpop.f32.mrf.mxu0
  %v482 = vadd.f32 %v468, %v481
  %483 = vdwg.mxu0
  %484 = vmatpush.bf16.msra.mxu0 %v409
  %485 = vmatpush.bf16.msra.mxu0 %v408
  %486 = vmatpush.bf16.msra.mxu0 %v407
  %487 = vmatpush.bf16.msra.mxu0 %v406
  %488 = vmatpush.bf16.msra.mxu0 %v405
  %489 = vmatpush.bf16.msra.mxu0 %v404
  %490 = vmatpush.bf16.msra.mxu0 %v403
  %491 = vmatpush.bf16.msra.mxu0 %v402
  %492 = vmatmul.bf16.gmra.mxu0 %v181
  %v493 = vpop.f32.mrf.mxu0
  %v494 = vadd.f32 %v480, %v493
  %v495 = vpop.f32.mrf.mxu0
  %v496 = vadd.f32 %v482, %v495
  %497 = vdwg.mxu0
  %v498 = vpack.c.bf16 %v494, %v494
  %v499 = vpack.c.bf16 %v496, %v496
  %500 = vst [vmem:[%s5] sm:$0xf] %v498
  %501 = vst [vmem:[%s5 + $0x4] sm:$0xf] %v499
  // Predicated region
  $region22: #{mmim_forward.1} parent=0 // pred_check
    _
  $region23: #{mmim_forward.1} parent=0 // pred_check_branch
    %503 = sbr.rel (0) target = $region25
  $region24: #{mmim_forward.1} parent=0 // pred_region
    _
  $region25: #{mmim_forward.1} parent=0 // pred_fallthru
    _
  // Predicated region
  $region26: #{mmim_forward.1} parent=0 // pred_check
    _
  $region27: #{mmim_forward.1} parent=0 // pred_check_branch
    %505 = sbr.rel (0) target = $region29
  $region28: #{mmim_forward.1} parent=0 // pred_region
    _
  $region29: #{mmim_forward.1} parent=0 // pred_fallthru
    _

</llo_original>
